<compile_context>
chip_gen: v5e
topology: v5e:2x2
jax: 0.10.0
libtpu: 0.0.40
codegen_flags: <defaults>
</compile_context>

<pallas_src>
import jax
import jax.numpy as jnp
from jax.experimental import pallas as pl
from jax.experimental.pallas import tpu as pltpu

_LANES = 128
_SUBLANES = 8


def _soft_exp_kernel(alpha_ref, x_ref, o_ref):
    a = alpha_ref[0]  # scalar alpha (f32) from SMEM

    # Exactly one of the three branches runs per invocation.
    @pl.when(a == 0.0)
    def _():
        o_ref[...] = x_ref[...]

    @pl.when(a < 0.0)
    def _():
        x = x_ref[...].astype(jnp.float32)
        inv_a = 1.0 / a  # hoisted scalar reciprocal (computed once per block)
        o_ref[...] = (-jnp.log(1.0 - a * (x + a)) * inv_a).astype(o_ref.dtype)

    @pl.when(a > 0.0)
    def _():
        x = x_ref[...].astype(jnp.float32)
        inv_a = 1.0 / a
        o_ref[...] = ((jnp.exp(a * x) - 1.0) * inv_a + a).astype(o_ref.dtype)


def soft_exponential(x, alpha, *, block_rows=1024):
    """Elementwise soft-exponential activation.

    `alpha` is a scalar (python float or jnp scalar). Branch selection happens
    inside the kernel on the prefetched scalar, so this also works when alpha
    is a traced parameter under jit.
    """
    orig_shape = x.shape
    dtype = x.dtype
    n = x.size

    flat = x.reshape(-1)

    # Pad only when needed (static Python check -> no pad op emitted for
    # nicely sized tensors) so the flat view maps onto whole (8,128) tiles.
    tile = _SUBLANES * _LANES
    n_pad = ((n + tile - 1) // tile) * tile
    if n_pad != n:
        flat = jnp.pad(flat, (0, n_pad - n))

    x2d = flat.reshape(-1, _LANES)            # (rows, 128), rows % 8 == 0
    rows = x2d.shape[0]
    br = min(block_rows, rows)                # multiple of 8 by construction
    grid = (pl.cdiv(rows, br),)

    alpha_arr = jnp.asarray(alpha, dtype=jnp.float32).reshape(1)

    out2d = pl.pallas_call(
        _soft_exp_kernel,
        out_shape=jax.ShapeDtypeStruct((rows, _LANES), dtype),
        grid_spec=pltpu.PrefetchScalarGridSpec(
            num_scalar_prefetch=1,
            grid=grid,
            in_specs=[pl.BlockSpec((br, _LANES), lambda i, a_ref: (i, 0))],
            out_specs=pl.BlockSpec((br, _LANES), lambda i, a_ref: (i, 0)),
        ),
        compiler_params=pltpu.CompilerParams(
            dimension_semantics=("parallel",)),
    )(alpha_arr, x2d)

    out = out2d.reshape(-1)
    if n_pad != n:
        out = out[:n]
    return out.reshape(orig_shape)


def _reference(x, alpha):
    """Pure-JAX reference mirroring the PyTorch forward (alpha: python float)."""
    xf = x.astype(jnp.float32)
    if alpha == 0.0:
        out = xf
    elif alpha < 0.0:
        out = -jnp.log(1.0 - alpha * (xf + alpha)) / alpha
    else:
        out = (jnp.exp(alpha * xf) - 1.0) / alpha + alpha
    return out.astype(x.dtype)


if __name__ == "__main__":
    key = jax.random.PRNGKey(0)
    # NCHW input consistent with how this activation is used inside conv nets.
    # Bounded inputs keep log(1 - alpha*(x + alpha)) in-domain for alpha < 0
    # (the module itself is only defined there), so the check is NaN-free.
    x = jax.random.uniform(key, (2, 4, 16, 16), dtype=jnp.float32,
                           minval=-1.0, maxval=1.0)

    # Module default is alpha=0.0 (identity); also exercise both nonzero branches.
    for alpha in (0.5, -0.5, 0.0):
        out = jax.block_until_ready(soft_exponential(x, alpha))
        ref = _reference(x, alpha)
        assert out.shape == x.shape and out.dtype == x.dtype
        assert jnp.allclose(out, ref, atol=1e-5, rtol=1e-5), f"mismatch at alpha={alpha}"

    # Native-dtype streaming check: bf16 in / bf16 out (f32 math inside kernel).
    x_bf16 = x.astype(jnp.bfloat16)
    out_bf16 = jax.block_until_ready(soft_exponential(x_bf16, 0.5))
    ref_bf16 = _reference(x_bf16, 0.5)
    assert out_bf16.dtype == jnp.bfloat16
    assert jnp.allclose(out_bf16.astype(jnp.float32), ref_bf16.astype(jnp.float32),
                        atol=2e-2, rtol=2e-2), "mismatch for bf16 input"

    # TODO(synk): autograd/learning of the alpha Parameter is not part of the
    # forward kernel (forward-only translation).
    print("KERNEL_OK")
</pallas_src>

<mosaic_0001>
module attributes {stable_mosaic.version = 11 : i64} {
  func.func @_soft_exp_kernel(%arg0: i32, %arg1: memref<1xf32, #tpu.memory_space<smem>>, %arg2: memref<16x128xf32, #tpu.memory_space<vmem>>, %arg3: memref<16x128xf32, #tpu.memory_space<vmem>>) attributes {dimension_semantics = [#tpu.dimension_semantics<parallel>], iteration_bounds = array<i64: 1>, scalar_prefetch = 1 : i64, scratch_operands = 0 : i64, tpu.core_type = #tpu.core_type<tc>, window_params = [{transform_indices = @transform_0, window_bounds = array<i64: 16, 128>}, {transform_indices = @transform_1, window_bounds = array<i64: 16, 128>}]} {
    %c0 = arith.constant 0 : index
    %0 = memref.load %arg1[%c0] : memref<1xf32, #tpu.memory_space<smem>>
    %cst = arith.constant 0.000000e+00 : f32
    %1 = arith.cmpf oeq, %0, %cst : f32
    %2 = arith.extui %1 : i1 to i32
    %c0_i32 = arith.constant 0 : i32
    %3 = arith.cmpi ne, %2, %c0_i32 : i32
    scf.if %3 {
      %c0_4 = arith.constant 0 : index
      %c0_5 = arith.constant 0 : index
      %10 = vector.load %arg2[%c0_4, %c0_5] : memref<16x128xf32, #tpu.memory_space<vmem>>, vector<16x128xf32>
      %c0_6 = arith.constant 0 : index
      %c0_7 = arith.constant 0 : index
      %11 = vector.load %arg3[%c0_6, %c0_7] : memref<16x128xf32, #tpu.memory_space<vmem>>, vector<16x128xf32>
      tpu.vector_store %arg3[%c0_6, %c0_7], %10 {strides = array<i32>} : memref<16x128xf32, #tpu.memory_space<vmem>>, vector<16x128xf32>,
    } else {
    }
    %cst_0 = arith.constant 0.000000e+00 : f32
    %4 = arith.cmpf olt, %0, %cst_0 : f32
    %5 = arith.extui %4 : i1 to i32
    %c0_i32_1 = arith.constant 0 : i32
    %6 = arith.cmpi ne, %5, %c0_i32_1 : i32
    scf.if %6 {
      %c0_4 = arith.constant 0 : index
      %c0_5 = arith.constant 0 : index
      %10 = vector.load %arg2[%c0_4, %c0_5] : memref<16x128xf32, #tpu.memory_space<vmem>>, vector<16x128xf32>
      %cst_6 = arith.constant 1.000000e+00 : f32
      %11 = arith.divf %cst_6, %0 : f32
      %12 = vector.broadcast %0 : f32 to vector<16x128xf32>
      %13 = arith.addf %10, %12 : vector<16x128xf32>
      %14 = vector.broadcast %0 : f32 to vector<16x128xf32>
      %15 = arith.mulf %14, %13 : vector<16x128xf32>
      %cst_7 = arith.constant 1.000000e+00 : f32
      %16 = vector.broadcast %cst_7 : f32 to vector<16x128xf32>
      %17 = arith.subf %16, %15 : vector<16x128xf32>
      %18 = math.log %17 : vector<16x128xf32>
      %cst_8 = arith.constant 0.000000e+00 : f32
      %19 = vector.broadcast %cst_8 : f32 to vector<16x128xf32>
      %20 = arith.subf %19, %18 : vector<16x128xf32>
      %21 = vector.broadcast %11 : f32 to vector<16x128xf32>
      %22 = arith.mulf %20, %21 : vector<16x128xf32>
      %c0_9 = arith.constant 0 : index
      %c0_10 = arith.constant 0 : index
      %23 = vector.load %arg3[%c0_9, %c0_10] : memref<16x128xf32, #tpu.memory_space<vmem>>, vector<16x128xf32>
      tpu.vector_store %arg3[%c0_9, %c0_10], %22 {strides = array<i32>} : memref<16x128xf32, #tpu.memory_space<vmem>>, vector<16x128xf32>,
    } else {
    }
    %cst_2 = arith.constant 0.000000e+00 : f32
    %7 = arith.cmpf ogt, %0, %cst_2 : f32
    %8 = arith.extui %7 : i1 to i32
    %c0_i32_3 = arith.constant 0 : i32
    %9 = arith.cmpi ne, %8, %c0_i32_3 : i32
    scf.if %9 {
      %c0_4 = arith.constant 0 : index
      %c0_5 = arith.constant 0 : index
      %10 = vector.load %arg2[%c0_4, %c0_5] : memref<16x128xf32, #tpu.memory_space<vmem>>, vector<16x128xf32>
      %cst_6 = arith.constant 1.000000e+00 : f32
      %11 = arith.divf %cst_6, %0 : f32
      %12 = vector.broadcast %0 : f32 to vector<16x128xf32>
      %13 = arith.mulf %12, %10 : vector<16x128xf32>
      %14 = math.exp %13 : vector<16x128xf32>
      %cst_7 = arith.constant 1.000000e+00 : f32
      %15 = vector.broadcast %cst_7 : f32 to vector<16x128xf32>
      %16 = arith.subf %14, %15 : vector<16x128xf32>
      %17 = vector.broadcast %11 : f32 to vector<16x128xf32>
      %18 = arith.mulf %16, %17 : vector<16x128xf32>
      %19 = vector.broadcast %0 : f32 to vector<16x128xf32>
      %20 = arith.addf %18, %19 : vector<16x128xf32>
      %c0_8 = arith.constant 0 : index
      %c0_9 = arith.constant 0 : index
      %21 = vector.load %arg3[%c0_8, %c0_9] : memref<16x128xf32, #tpu.memory_space<vmem>>, vector<16x128xf32>
      tpu.vector_store %arg3[%c0_8, %c0_9], %20 {strides = array<i32>} : memref<16x128xf32, #tpu.memory_space<vmem>>, vector<16x128xf32>,
    } else {
    }
    return
  }
  func.func @transform_0(%arg0: i32, %arg1: memref<1xf32, #tpu.memory_space<smem>>) -> (i32, i32) {
    %c0_i32 = arith.constant 0 : i32
    %c0_i32_0 = arith.constant 0 : i32
    return %arg0, %c0_i32 : i32, i32
  }
  func.func @transform_1(%arg0: i32, %arg1: memref<1xf32, #tpu.memory_space<smem>>) -> (i32, i32) {
    %c0_i32 = arith.constant 0 : i32
    %c0_i32_0 = arith.constant 0 : i32
    return %arg0, %c0_i32 : i32, i32
  }
}

</mosaic_0001>

<llo_original>
// kernel: tpu_custom_call.1
$region0: #{tpu_custom_call.1}
  #allocation0 [shape = 'u32[]', space=smem, size = 0x4, offset = 0x4, fixed_abs, tag = 'smem constant byte address 0x4 - core index']
  #allocation1 [shape = 'u32[72,128]{1,0:T(1,128)}', space=vmem, size = 0x9000, scoped, tag = 'internal scratch']
  #allocation2 [shape = 's32[1]{0}', space=sflag, size = 0x4, scoped, tag = 'scoped memory for tpu_custom_call.1']
  #allocation3 [shape = 'f32[1]{0:T(128)S(6)}', space=smem, size = 0x200, scoped, tag = 'prefetched SMEM operand 0']
  %s0 = inlined_call_operand.<no memory space> [shape: f32[1], index: 0, kind: input, shape index: {}]
  %s1 = inlined_call_operand.hbm [shape: f32[16,128], index: 1, kind: input, shape index: {}]
  %s2 = inlined_call_operand.hbm [shape: f32[16,128], index: 2, kind: output, shape index: {}]
  %s3 = sld [smem:[#allocation0]]
  $region30: #{tpu_custom_call.1} parent=0
    _
  %s5 = ssub.s32 1, %s3
  %s6 = scalar_select 0, %s5, %s3
  %7 = sst [smem:[#allocation3]] %s0
  $region1: #{tpu_custom_call.1} parent=0
    #allocation4 [shape = 'u8[8192]{0}', space=vmem, size = 0x2000, scoped, tag = 'input window, operand 1, single buffered']
    #allocation5 [shape = 's32[1]{0}', space=sflag, size = 0x4, scoped, tag = 'scoped memory for tpu_custom_call.1']
    #allocation6 [shape = 's32[1]{0}', space=sflag, size = 0x4, scoped, tag = 'scoped memory for tpu_custom_call.1']
    #allocation7 [shape = 'u8[8192]{0}', space=vmem, size = 0x2000, scoped, tag = 'output window, operand 0, single buffered']
    %8 = vsyncpa [#allocation5], 0
    %9 = vsyncpa [#allocation6], 0
    // Predicated region
    $region2: #{tpu_custom_call.1} parent=1 // pred_check
      _
    $region3: #{tpu_custom_call.1} parent=1 // pred_check_branch
      %11 = sbr.rel (0) target = $region5
    $region4: #{tpu_custom_call.1} parent=1 // pred_region
      %13 = vsyncadd [#allocation5], 0
      %s14 = sshll.u32 %s1, 4
      %s15 = int_to_ptr.hbm [resolvable:$true] %s14
      %s16 = sshll.u32 [#allocation4], 4
      %s17 = int_to_ptr.vmem [resolvable:$true] %s16
      %22 = dma.hbm_to_vmem [thread:$0]  %s15, 256, %s17, [#allocation5], 128, 128, 8
    $region5: #{tpu_custom_call.1} parent=1 // pred_fallthru
      _
    // Predicated region
    $region6: #{tpu_custom_call.1} parent=1 // pred_check
      _
    $region7: #{tpu_custom_call.1} parent=1 // pred_check_branch
      %24 = sbr.rel (0) target = $region9
    $region8: #{tpu_custom_call.1} parent=1 // pred_region
      %26 = dma.done [#allocation5], 256
    $region9: #{tpu_custom_call.1} parent=1 // pred_fallthru
      _
    %s27 = sld [smem:[#allocation3]]
    %p28 = scmp.eq.f32.partialorder %s27, 0.0
    // Predicated region
    $region10: #{tpu_custom_call.1} parent=1 // pred_check
      %p29 = pneg %p28
    $region11: #{tpu_custom_call.1} parent=1 // pred_check_branch
      %31 = sbr.rel (%p29) target = $region13
    $region12: #{tpu_custom_call.1} parent=1 // pred_region
      %v32 = vld [vmem:[#allocation4] sm:$0xff]
      %v33 = vld [vmem:[#allocation4 + $0x8] sm:$0xff]
      %34 = vst [vmem:[#allocation7] sm:$0xff] %v32
      %35 = vst [vmem:[#allocation7 + $0x8] sm:$0xff] %v33
    $region13: #{tpu_custom_call.1} parent=1 // pred_fallthru
      _
    %p36 = scmp.lt.f32.partialorder %s27, 0.0
    // Predicated region
    $region14: #{tpu_custom_call.1} parent=1 // pred_check
      %p37 = pneg %p36
    $region15: #{tpu_custom_call.1} parent=1 // pred_check_branch
      %39 = sbr.rel (%p37) target = $region17
    $region16: #{tpu_custom_call.1} parent=1 // pred_region
      %v40 = vld [vmem:[#allocation4] sm:$0xff]
      %v41 = vld [vmem:[#allocation4 + $0x8] sm:$0xff]
      %v42 = vstv %s27
      %v43 = vrcp.pop %v42
      %v44 = vmul.f32 %v42, %v43
      %v45 = vsub.f32 1.0, %v44
      %v46 = vmul.f32 %v43, %v45
      %v47 = vadd.f32 %v43, %v46
      %vm48 = vweird.f32 %v42
      %vm49 = vweird.f32 %v43
      %vm50 = vmor %vm48, %vm49
      %v51 = vsel %vm50, %v43, %v47
      %v52 = vand.u32 2147483647, %v42
      %vm53 = vcmp.eq.f32.partialorder %v52, 8.507059e+37
      %v54 = vand.u32 %v42, 2147483648
      %v55 = vor.u32 1.1754944e-38, %v54
      %v56 = vsel %vm53, %v55, %v51
      %s57 = vtos %v56
      %v58 = vstv %s27
      %v59 = vadd.f32 %v40, %v58
      %v60 = vadd.f32 %v41, %v58
      %v61 = vmul.f32 %v58, %v59
      %v62 = vmul.f32 %v58, %v60
      %v63 = vsub.f32 1.0, %v61
      %v64 = vsub.f32 1.0, %v62
      %v65 = vlog2.pop %v63
      %v66 = vmul.f32 %v65, 0.6931472
      %v67 = vlog2.pop %v64
      %v68 = vmul.f32 %v67, 0.6931472
      %v69 = vsub.f32 0.0, %v66
      %v70 = vsub.f32 0.0, %v68
      %v71 = vstv %s57
      %v72 = vmul.f32 %v69, %v71
      %v73 = vmul.f32 %v70, %v71
      %74 = vst [vmem:[#allocation7] sm:$0xff] %v72
      %75 = vst [vmem:[#allocation7 + $0x8] sm:$0xff] %v73
    $region17: #{tpu_custom_call.1} parent=1 // pred_fallthru
      _
    %p76 = scmp.gt.f32.partialorder %s27, 0.0
    // Predicated region
    $region18: #{tpu_custom_call.1} parent=1 // pred_check
      %p77 = pneg %p76
    $region19: #{tpu_custom_call.1} parent=1 // pred_check_branch
      %79 = sbr.rel (%p77) target = $region21
    $region20: #{tpu_custom_call.1} parent=1 // pred_region
      %v80 = vld [vmem:[#allocation4] sm:$0xff]
      %v81 = vld [vmem:[#allocation4 + $0x8] sm:$0xff]
      %v82 = vstv %s27
      %v83 = vrcp.pop %v82
      %v84 = vmul.f32 %v82, %v83
      %v85 = vsub.f32 1.0, %v84
      %v86 = vmul.f32 %v83, %v85
      %v87 = vadd.f32 %v83, %v86
      %vm88 = vweird.f32 %v82
      %vm89 = vweird.f32 %v83
      %vm90 = vmor %vm88, %vm89
      %v91 = vsel %vm90, %v83, %v87
      %v92 = vand.u32 2147483647, %v82
      %vm93 = vcmp.eq.f32.partialorder %v92, 8.507059e+37
      %v94 = vand.u32 %v82, 2147483648
      %v95 = vor.u32 1.1754944e-38, %v94
      %v96 = vsel %vm93, %v95, %v91
      %s97 = vtos %v96
      %v98 = vstv %s27
      %v99 = vmul.f32 %v98, %v80
      %v100 = vmul.f32 %v98, %v81
      %v101 = vmul.f32 %v99, 1.442695
      %v102 = vpow.pop %v101
      %v103 = vmul.f32 %v100, 1.442695
      %v104 = vpow.pop %v103
      %v105 = vsub.f32 %v102, 1.0
      %v106 = vsub.f32 %v104, 1.0
      %v107 = vstv %s97
      %v108 = vmul.f32 %v105, %v107
      %v109 = vmul.f32 %v106, %v107
      %v110 = vadd.f32 %v108, %v98
      %v111 = vadd.f32 %v109, %v98
      %112 = vst [vmem:[#allocation7] sm:$0xff] %v110
      %113 = vst [vmem:[#allocation7 + $0x8] sm:$0xff] %v111
    $region21: #{tpu_custom_call.1} parent=1 // pred_fallthru
      _
    // Predicated region
    $region22: #{tpu_custom_call.1} parent=1 // pred_check
      _
    $region23: #{tpu_custom_call.1} parent=1 // pred_check_branch
      %115 = sbr.rel (0) target = $region25
    $region24: #{tpu_custom_call.1} parent=1 // pred_region
      %117 = vsyncadd [#allocation6], 0
      %s118 = sshll.u32 [#allocation7], 4
      %s119 = int_to_ptr.vmem [resolvable:$true] %s118
      %s120 = sshll.u32 %s2, 4
      %s121 = int_to_ptr.hbm [resolvable:$true] %s120
      %126 = dma.vmem_to_hbm [thread:$0]  %s119, 256, %s121, [#allocation6], 128, 128, 8
    $region25: #{tpu_custom_call.1} parent=1 // pred_fallthru
      _
    // Predicated region
    $region26: #{tpu_custom_call.1} parent=1 // pred_check
      _
    $region27: #{tpu_custom_call.1} parent=1 // pred_check_branch
      %128 = sbr.rel (0) target = $region29
    $region28: #{tpu_custom_call.1} parent=1 // pred_region
      %130 = dma.done [#allocation6], 256
    $region29: #{tpu_custom_call.1} parent=1 // pred_fallthru
      _
    %131 = vsyncpa [#allocation5], 1
    %132 = vsyncpa [#allocation6], 1

</llo_original>
